<compile_context>
chip_gen: v7x
topology: tpu7x:2x2x1
jax: 0.10.0
libtpu: 0.0.40
codegen_flags: <defaults>
</compile_context>

<pallas_src>
import functools

import jax
import jax.numpy as jnp
from jax.experimental import pallas as pl
from jax.experimental.pallas import tpu as pltpu


def _round_up(x, m):
    return (x + m - 1) // m * m


def gcn_kernel(adj_ref, xw_ref, b_ref, out_ref, *, tk, xw_resident):
    k = pl.program_id(1)

    # Initialise the resident output tile with the broadcast bias once per
    # dst-node tile; no separate epilogue pass is needed.
    @pl.when(k == 0)
    def _():
        out_ref[...] = jnp.broadcast_to(b_ref[...], out_ref.shape)

    if xw_resident:
        # Whole XW lives in VMEM (constant index_map); slice the k-th chunk.
        off = pl.multiple_of(k * tk, tk)
        xw = xw_ref[pl.ds(off, tk), :]
    else:
        xw = xw_ref[...]

    # int8 {0,1} -> exact bf16, bf16 x bf16 MXU dot, exact f32 accumulation
    # directly into the (lane-dense, 128-wide) output tile.
    out_ref[...] += jnp.dot(adj_ref[...].astype(jnp.bfloat16), xw,
                            preferred_element_type=jnp.float32)


def gcn_layer(adj, x, w, b, *, tile_m=512, tile_k=1024,
              xw_resident_max_bytes=4 << 20):
    """GCN layer forward: (adj @ x) @ w.T + b.

    adj: [N, N] dst<-src adjacency (adj[i, j] = 1 iff edge j -> i); any dtype
         representing {0, 1} (pass int8, already padded, to skip wrapper copies)
    x:   [N, F_in]  node features
    w:   [F_out, F_in]  nn.Linear weight (PyTorch layout)
    b:   [F_out]  nn.Linear bias
    returns [N, F_out] float32
    """
    n, f_in = x.shape
    f_out = w.shape[0]
    f_out_p = _round_up(f_out, 128)           # lane-dense output / XW / bias

    # int8 adjacency blocks want a sublane multiple of 32; lanes multiple of 128.
    tm = _round_up(min(tile_m, n), 32)
    tk = _round_up(min(tile_k, n), 128)
    n_m = _round_up(n, tm)
    n_k = _round_up(n, tk)
    grid = (n_m // tm, n_k // tk)
    # NOTE(v7x): for best 2-TensorCore balance pick tm so grid[0] is even >= 2.

    # ---- adjacency: 1 byte/edge in HBM; skip cast/pad if already conforming.
    adj_i8 = adj if adj.dtype == jnp.int8 else adj.astype(jnp.int8)
    if adj_i8.shape != (n_m, n_k):
        adj_i8 = jnp.zeros((n_m, n_k), jnp.int8).at[:n, :n].set(adj_i8)

    # ---- fuse the Linear weight up front: XW = X @ W.T (f32 math -> bf16),
    # node axis padded to n_k (pad rows hit only zero adjacency columns).
    xw = jnp.dot(x.astype(jnp.float32), jnp.transpose(w.astype(jnp.float32)),
                 precision=jax.lax.Precision.HIGHEST).astype(jnp.bfloat16)
    xw_p = jnp.zeros((n_k, f_out_p), jnp.bfloat16).at[:n, :f_out].set(xw)

    b_p = jnp.zeros((1, f_out_p), jnp.float32).at[:, :f_out].set(
        jnp.reshape(b.astype(jnp.float32), (1, f_out)))

    # ---- XW residency: keep the whole XW in VMEM when small (saves re-DMAing
    # it once per dst-node tile — matters most on v5e's lower HBM bandwidth).
    xw_vmem_bytes = n_k * f_out_p * 2
    xw_resident = xw_vmem_bytes <= xw_resident_max_bytes
    if xw_resident:
        xw_spec = pl.BlockSpec((n_k, f_out_p), lambda i, k: (0, 0))
        xw_stream_bytes = xw_vmem_bytes
    else:
        xw_spec = pl.BlockSpec((tk, f_out_p), lambda i, k: (k, 0))
        xw_stream_bytes = grid[0] * n_k * f_out_p * 2   # re-streamed per i tile

    cost = pl.CostEstimate(
        flops=2 * n_m * n_k * f_out_p,
        transcendentals=0,
        bytes_accessed=(n_m * n_k * 1          # int8 adjacency, single pass
                        + xw_stream_bytes
                        + f_out_p * 4          # bias
                        + n_m * f_out_p * 4),  # output
    )

    # ---- explicit VMEM budget (double buffers), capped for v7x's 64 MiB.
    vmem_need = (2 * tm * tk                                   # adj (int8)
                 + 2 * (xw_vmem_bytes if xw_resident else tk * f_out_p * 2)
                 + 2 * tm * f_out_p * 4                        # out (f32)
                 + 2 * f_out_p * 4)                            # bias
    vmem_limit = int(min(64 << 20, max(32 << 20, 2 * vmem_need)))

    kernel = functools.partial(gcn_kernel, tk=tk, xw_resident=xw_resident)

    out_p = pl.pallas_call(
        kernel,
        out_shape=jax.ShapeDtypeStruct((n_m, f_out_p), jnp.float32),
        grid_spec=pltpu.PrefetchScalarGridSpec(
            num_scalar_prefetch=0,
            grid=grid,
            in_specs=[
                pl.BlockSpec((tm, tk), lambda i, k: (i, k)),      # adj tile
                xw_spec,                                          # XW
                pl.BlockSpec((1, f_out_p), lambda i, k: (0, 0)),  # bias
            ],
            out_specs=pl.BlockSpec((tm, f_out_p), lambda i, k: (i, 0)),
        ),
        compiler_params=pltpu.CompilerParams(
            dimension_semantics=("parallel", "arbitrary"),
            vmem_limit_bytes=vmem_limit),
        cost_estimate=cost,
    )(adj_i8, xw_p, b_p)

    return out_p[:n, :f_out]


if __name__ == "__main__":
    key = jax.random.PRNGKey(0)
    k_adj, k_x, k_w, k_b = jax.random.split(key, 4)

    N = 160       # number of graph nodes (small, but spans >1 tile per axis)
    F_IN = 16     # in_features
    F_OUT = 8     # out_features

    # Deterministic synthetic directed graph, no self loops.
    adj = (jax.random.uniform(k_adj, (N, N)) < 0.2).astype(jnp.float32)
    adj = adj * (1.0 - jnp.eye(N, dtype=jnp.float32))

    # Node features.
    x = jax.random.normal(k_x, (N, F_IN), dtype=jnp.float32)

    # nn.Linear(in_features, out_features) init: U(-1/sqrt(in), 1/sqrt(in)).
    bound = 1.0 / (F_IN ** 0.5)
    w = jax.random.uniform(k_w, (F_OUT, F_IN), minval=-bound, maxval=bound,
                           dtype=jnp.float32)
    b = jax.random.uniform(k_b, (F_OUT,), minval=-bound, maxval=bound,
                           dtype=jnp.float32)

    # References:
    #  * tight — same bf16-quantised XW the kernel consumes, f32 accumulation
    #  * loose — full f32 math of the original module (bounds bf16 rounding)
    xw_q = jnp.dot(x, w.T, precision=jax.lax.Precision.HIGHEST
                   ).astype(jnp.bfloat16).astype(jnp.float32)
    ref_tight = jnp.dot(adj, xw_q,
                        precision=jax.lax.Precision.HIGHEST) + b[None, :]
    ref_f32 = jnp.dot(jnp.dot(adj, x, precision=jax.lax.Precision.HIGHEST),
                      w.T, precision=jax.lax.Precision.HIGHEST) + b[None, :]

    # Config 1: large-tile defaults (single tile per axis, XW fully resident).
    out1 = jax.block_until_ready(gcn_layer(adj, x, w, b))
    # Config 2: small tiles + forced XW streaming, so the demo exercises the
    # (parallel, arbitrary) grid = (3, 2), the resident-output accumulation
    # over k and the padding paths.
    out2 = jax.block_until_ready(
        gcn_layer(adj, x, w, b, tile_m=64, tile_k=128,
                  xw_resident_max_bytes=0))

    for out in (out1, out2):
        assert out.shape == (N, F_OUT)
        assert jnp.allclose(out, ref_tight, atol=1e-4, rtol=1e-4), \
            float(jnp.max(jnp.abs(out - ref_tight)))
        assert jnp.allclose(out, ref_f32, atol=1e-1, rtol=1e-1), \
            float(jnp.max(jnp.abs(out - ref_f32)))

    print("KERNEL_OK")
</pallas_src>

<mosaic_0001>
module attributes {stable_mosaic.version = 11 : i64} {
  func.func @gcn_kernel(%arg0: i32, %arg1: i32, %arg2: memref<160x256xi8, #tpu.memory_space<vmem>>, %arg3: memref<256x128xbf16, #tpu.memory_space<vmem>>, %arg4: memref<1x128xf32, #tpu.memory_space<vmem>>, %arg5: memref<160x128xf32, #tpu.memory_space<vmem>>) attributes {dimension_semantics = [#tpu.dimension_semantics<parallel>, #tpu.dimension_semantics<arbitrary>], iteration_bounds = array<i64: 1, 1>, scalar_prefetch = 0 : i64, scratch_operands = 0 : i64, tpu.core_type = #tpu.core_type<tc>, window_params = [{transform_indices = @transform_0, window_bounds = array<i64: 160, 256>}, {pipeline_mode = #tpu.pipeline_mode<synchronous>, transform_indices = @transform_1, window_bounds = array<i64: 256, 128>}, {pipeline_mode = #tpu.pipeline_mode<synchronous>, transform_indices = @transform_2, window_bounds = array<i64: 1, 128>}, {transform_indices = @transform_3, window_bounds = array<i64: 160, 128>}]} {
    %c0_i32 = arith.constant 0 : i32
    %0 = arith.cmpi eq, %arg1, %c0_i32 : i32
    %1 = arith.extui %0 : i1 to i32
    %c0_i32_0 = arith.constant 0 : i32
    %2 = arith.cmpi ne, %1, %c0_i32_0 : i32
    scf.if %2 {
      %c0_7 = arith.constant 0 : index
      %c0_8 = arith.constant 0 : index
      %13 = vector.load %arg4[%c0_7, %c0_8] : memref<1x128xf32, #tpu.memory_space<vmem>>, vector<1x128xf32>
      %14 = vector.shape_cast %13 : vector<1x128xf32> to vector<1x128xf32>
      %15 = vector.broadcast %14 : vector<1x128xf32> to vector<160x128xf32>
      %c0_9 = arith.constant 0 : index
      %c0_10 = arith.constant 0 : index
      %16 = vector.load %arg5[%c0_9, %c0_10] : memref<160x128xf32, #tpu.memory_space<vmem>>, vector<160x128xf32>
      tpu.vector_store %arg5[%c0_9, %c0_10], %15 {strides = array<i32>} : memref<160x128xf32, #tpu.memory_space<vmem>>, vector<160x128xf32>,
    } else {
    }
    %c256_i32 = arith.constant 256 : i32
    %3 = arith.muli %arg1, %c256_i32 : i32
    %4 = tpu.assume_multiple %3, 256 : i32
    %5 = arith.index_cast %4 : i32 to index
    %c0 = arith.constant 0 : index
    %6 = vector.load %arg3[%5, %c0] : memref<256x128xbf16, #tpu.memory_space<vmem>>, vector<256x128xbf16>
    %c0_1 = arith.constant 0 : index
    %c0_2 = arith.constant 0 : index
    %7 = vector.load %arg5[%c0_1, %c0_2] : memref<160x128xf32, #tpu.memory_space<vmem>>, vector<160x128xf32>
    %c0_3 = arith.constant 0 : index
    %c0_4 = arith.constant 0 : index
    %8 = vector.load %arg2[%c0_3, %c0_4] : memref<160x256xi8, #tpu.memory_space<vmem>>, vector<160x256xi8>
    %9 = arith.sitofp %8 : vector<160x256xi8> to vector<160x256xbf16>
    %cst = arith.constant dense<0.000000e+00> : vector<160x128xf32>
    %10 = tpu.matmul %9, %6, %cst {dimension_numbers = #tpu.dot_dimension_numbers<[1], [0], [0], [1], [0, 0, 1, 1], [], []>} : vector<160x256xbf16>, vector<256x128xbf16>, vector<160x128xf32> -> vector<160x128xf32>
    %11 = arith.addf %7, %10 : vector<160x128xf32>
    %c0_5 = arith.constant 0 : index
    %c0_6 = arith.constant 0 : index
    %12 = vector.load %arg5[%c0_5, %c0_6] : memref<160x128xf32, #tpu.memory_space<vmem>>, vector<160x128xf32>
    tpu.vector_store %arg5[%c0_5, %c0_6], %11 {strides = array<i32>} : memref<160x128xf32, #tpu.memory_space<vmem>>, vector<160x128xf32>,
    return
  }
  func.func @transform_0(%arg0: i32, %arg1: i32) -> (i32, i32) {
    %c0_i32 = arith.constant 0 : i32
    return %arg0, %arg1 : i32, i32
  }
  func.func @transform_1(%arg0: i32, %arg1: i32) -> (i32, i32) {
    %c0_i32 = arith.constant 0 : i32
    %c0_i32_0 = arith.constant 0 : i32
    %c0_i32_1 = arith.constant 0 : i32
    return %c0_i32, %c0_i32_0 : i32, i32
  }
  func.func @transform_2(%arg0: i32, %arg1: i32) -> (i32, i32) {
    %c0_i32 = arith.constant 0 : i32
    %c0_i32_0 = arith.constant 0 : i32
    %c0_i32_1 = arith.constant 0 : i32
    return %c0_i32, %c0_i32_0 : i32, i32
  }
  func.func @transform_3(%arg0: i32, %arg1: i32) -> (i32, i32) {
    %c0_i32 = arith.constant 0 : i32
    %c0_i32_0 = arith.constant 0 : i32
    return %arg0, %c0_i32 : i32, i32
  }
}

</mosaic_0001>

<llo_original>
// kernel: tpu_custom_call.1
$region0: #{tpu_custom_call.1}
  #allocation0 [shape = 'u32[]', space=smem, size = 0x4, offset = 0x4, fixed_abs, tag = 'smem constant byte address 0x4 - core index']
  #allocation1 [shape = 'u32[144,128]{1,0:T(1,128)}', space=vmem, size = 0x12000, scoped, tag = 'internal scratch']
  %s0 = inlined_call_operand.hbm [shape: s8[160,256], index: 0, kind: input, shape index: {}]
  %s1 = inlined_call_operand.hbm [shape: bf16[256,128], index: 1, kind: input, shape index: {}]
  %s2 = inlined_call_operand.vmem [shape: f32[1,128], index: 2, kind: input, shape index: {}]
  %s3 = inlined_call_operand.hbm [shape: f32[160,128], index: 3, kind: output, shape index: {}]
  %s4 = sld [smem:[#allocation0]]
  $region34: #{tpu_custom_call.1} parent=0
    _
  %s6 = ssub.s32 1, %s4
  %s7 = scalar_select 0, %s6, %s4
  $region1: #{tpu_custom_call.1} parent=0
    #allocation2 [shape = 'u8[40960]{0}', space=vmem, size = 0xa000, scoped, tag = 'input window, operand 0, single buffered']
    #allocation3 [shape = 's32[1]{0}', space=sflag, size = 0x4, scoped, tag = 'scoped memory for tpu_custom_call.1']
    #allocation4 [shape = 's32[1]{0}', space=sflag, size = 0x4, scoped, tag = 'scoped memory for tpu_custom_call.1']
    #allocation5 [shape = 'u8[65536]{0}', space=vmem, size = 0x10000, scoped, tag = 'input window, operand 1, single buffered']
    #allocation6 [shape = 's32[1]{0}', space=sflag, size = 0x4, scoped, tag = 'scoped memory for tpu_custom_call.1']
    #allocation7 [shape = 'u8[81920]{0}', space=vmem, size = 0x14000, scoped, tag = 'output window, operand 0, single buffered']
    %8 = vsyncpa [#allocation3], 0
    %9 = vsyncpa [#allocation6], 0
    %10 = vsyncpa [#allocation4], 0
    // Predicated region
    $region2: #{tpu_custom_call.1} parent=1 // pred_check
      _
    $region3: #{tpu_custom_call.1} parent=1 // pred_check_branch
      %12 = sbr.rel (0) target = $region5
    $region4: #{tpu_custom_call.1} parent=1 // pred_region
      %s14 = ssub.s32 1280, 1280
      %15 = vsyncadd [#allocation3], %s14
      %s16 = sshll.u32 [#allocation2], 4
      %s17 = int_to_ptr.vmem [resolvable:$true] %s16
      %22 = dma.hbm_to_vmem [thread:$0]  %s0, 1280, %s17, [#allocation3], 256, 256, 16
    $region5: #{tpu_custom_call.1} parent=1 // pred_fallthru
      _
    // Predicated region
    $region6: #{tpu_custom_call.1} parent=1 // pred_check
      _
    $region7: #{tpu_custom_call.1} parent=1 // pred_check_branch
      %24 = sbr.rel (0) target = $region9
    $region8: #{tpu_custom_call.1} parent=1 // pred_region
      %s26 = ssub.s32 2048, 2048
      %27 = vsyncadd [#allocation6], %s26
      %s28 = sshll.u32 [#allocation5], 4
      %s29 = int_to_ptr.vmem [resolvable:$true] %s28
      %34 = dma.hbm_to_vmem [thread:$0]  %s1, 2048, %s29, [#allocation6], 64, 64, 4
    $region9: #{tpu_custom_call.1} parent=1 // pred_fallthru
      _
    // Predicated region
    $region10: #{tpu_custom_call.1} parent=1 // pred_check
      _
    $region11: #{tpu_custom_call.1} parent=1 // pred_check_branch
      %36 = sbr.rel (0) target = $region13
    $region12: #{tpu_custom_call.1} parent=1 // pred_region
      _
    $region13: #{tpu_custom_call.1} parent=1 // pred_fallthru
      _
    // Predicated region
    $region14: #{tpu_custom_call.1} parent=1 // pred_check
      _
    $region15: #{tpu_custom_call.1} parent=1 // pred_check_branch
      %38 = sbr.rel (0) target = $region17
    $region16: #{tpu_custom_call.1} parent=1 // pred_region
      %39 = dma.done [#allocation3], 1280
    $region17: #{tpu_custom_call.1} parent=1 // pred_fallthru
      _
    // Predicated region
    $region18: #{tpu_custom_call.1} parent=1 // pred_check
      _
    $region19: #{tpu_custom_call.1} parent=1 // pred_check_branch
      %41 = sbr.rel (0) target = $region21
    $region20: #{tpu_custom_call.1} parent=1 // pred_region
      %42 = dma.done [#allocation6], 2048
    $region21: #{tpu_custom_call.1} parent=1 // pred_fallthru
      _
    %p44 = scmp.eq.s32.totalorder 0, 0
    // Predicated region
    $region22: #{tpu_custom_call.1} parent=1 // pred_check
      %p45 = pneg %p44
    $region23: #{tpu_custom_call.1} parent=1 // pred_check_branch
      %47 = sbr.rel (%p45) target = $region25
    $region24: #{tpu_custom_call.1} parent=1 // pred_region
      %v48 = vld [vmem:[%s2] sm:$0x1]
      %v50 = vlaneseq
      %v51 = vshrl.u32 %v50, 7
      %v52 = vsub.s32 0, %v51
      %v53 = vrot.slane %v48, %v52
      %55 = vst [vmem:[#allocation7] sm:$0xff] %v53
      %56 = vst [vmem:[#allocation7 + $0x8] sm:$0xff] %v53
      %57 = vst [vmem:[#allocation7 + $0x10] sm:$0xff] %v53
      %58 = vst [vmem:[#allocation7 + $0x18] sm:$0xff] %v53
      %59 = vst [vmem:[#allocation7 + $0x20] sm:$0xff] %v53
      %60 = vst [vmem:[#allocation7 + $0x28] sm:$0xff] %v53
      %61 = vst [vmem:[#allocation7 + $0x30] sm:$0xff] %v53
      %62 = vst [vmem:[#allocation7 + $0x38] sm:$0xff] %v53
      %63 = vst [vmem:[#allocation7 + $0x40] sm:$0xff] %v53
      %64 = vst [vmem:[#allocation7 + $0x48] sm:$0xff] %v53
      %65 = vst [vmem:[#allocation7 + $0x50] sm:$0xff] %v53
      %66 = vst [vmem:[#allocation7 + $0x58] sm:$0xff] %v53
      %67 = vst [vmem:[#allocation7 + $0x60] sm:$0xff] %v53
      %68 = vst [vmem:[#allocation7 + $0x68] sm:$0xff] %v53
      %69 = vst [vmem:[#allocation7 + $0x70] sm:$0xff] %v53
      %70 = vst [vmem:[#allocation7 + $0x78] sm:$0xff] %v53
      %71 = vst [vmem:[#allocation7 + $0x80] sm:$0xff] %v53
      %72 = vst [vmem:[#allocation7 + $0x88] sm:$0xff] %v53
      %73 = vst [vmem:[#allocation7 + $0x90] sm:$0xff] %v53
      %74 = vst [vmem:[#allocation7 + $0x98] sm:$0xff] %v53
    $region25: #{tpu_custom_call.1} parent=1 // pred_fallthru
      _
    %s75 = smul.u32 0, 256
    %s76 = sshra.s32 %s75, 3
    %s77 = sand.u32 %s75, 7
    %s78 = smul.addr %s76, 4
    %s79 = scalar_lea.vmem [#allocation5], %s78
    %v80 = vld [vmem:[%s79] sm:$0xf]
    %v81 = vld [vmem:[%s79 + $0x4] sm:$0xf]
    %v82 = vld [vmem:[%s79 + $0x8] sm:$0xf]
    %v83 = vld [vmem:[%s79 + $0xc] sm:$0xf]
    %v84 = vld [vmem:[%s79 + $0x10] sm:$0xf]
    %v85 = vld [vmem:[%s79 + $0x14] sm:$0xf]
    %v86 = vld [vmem:[%s79 + $0x18] sm:$0xf]
    %v87 = vld [vmem:[%s79 + $0x1c] sm:$0xf]
    %v88 = vld [vmem:[%s79 + $0x20] sm:$0xf]
    %v89 = vld [vmem:[%s79 + $0x24] sm:$0xf]
    %v90 = vld [vmem:[%s79 + $0x28] sm:$0xf]
    %v91 = vld [vmem:[%s79 + $0x2c] sm:$0xf]
    %v92 = vld [vmem:[%s79 + $0x30] sm:$0xf]
    %v93 = vld [vmem:[%s79 + $0x34] sm:$0xf]
    %v94 = vld [vmem:[%s79 + $0x38] sm:$0xf]
    %v95 = vld [vmem:[%s79 + $0x3c] sm:$0xf]
    %v96 = vld [vmem:[%s79 + $0x40] sm:$0xf]
    %v97 = vld [vmem:[%s79 + $0x44] sm:$0xf]
    %v98 = vld [vmem:[%s79 + $0x48] sm:$0xf]
    %v99 = vld [vmem:[%s79 + $0x4c] sm:$0xf]
    %v100 = vld [vmem:[%s79 + $0x50] sm:$0xf]
    %v101 = vld [vmem:[%s79 + $0x54] sm:$0xf]
    %v102 = vld [vmem:[%s79 + $0x58] sm:$0xf]
    %v103 = vld [vmem:[%s79 + $0x5c] sm:$0xf]
    %v104 = vld [vmem:[%s79 + $0x60] sm:$0xf]
    %v105 = vld [vmem:[%s79 + $0x64] sm:$0xf]
    %v106 = vld [vmem:[%s79 + $0x68] sm:$0xf]
    %v107 = vld [vmem:[%s79 + $0x6c] sm:$0xf]
    %v108 = vld [vmem:[%s79 + $0x70] sm:$0xf]
    %v109 = vld [vmem:[%s79 + $0x74] sm:$0xf]
    %v110 = vld [vmem:[%s79 + $0x78] sm:$0xf]
    %v111 = vld [vmem:[%s79 + $0x7c] sm:$0xf]
    %v112 = vld [vmem:[#allocation7] sm:$0xff]
    %v113 = vld [vmem:[#allocation7 + $0x8] sm:$0xff]
    %v114 = vld [vmem:[#allocation7 + $0x10] sm:$0xff]
    %v115 = vld [vmem:[#allocation7 + $0x18] sm:$0xff]
    %v116 = vld [vmem:[#allocation7 + $0x20] sm:$0xff]
    %v117 = vld [vmem:[#allocation7 + $0x28] sm:$0xff]
    %v118 = vld [vmem:[#allocation7 + $0x30] sm:$0xff]
    %v119 = vld [vmem:[#allocation7 + $0x38] sm:$0xff]
    %v120 = vld [vmem:[#allocation7 + $0x40] sm:$0xff]
    %v121 = vld [vmem:[#allocation7 + $0x48] sm:$0xff]
    %v122 = vld [vmem:[#allocation7 + $0x50] sm:$0xff]
    %v123 = vld [vmem:[#allocation7 + $0x58] sm:$0xff]
    %v124 = vld [vmem:[#allocation7 + $0x60] sm:$0xff]
    %v125 = vld [vmem:[#allocation7 + $0x68] sm:$0xff]
    %v126 = vld [vmem:[#allocation7 + $0x70] sm:$0xff]
    %v127 = vld [vmem:[#allocation7 + $0x78] sm:$0xff]
    %v128 = vld [vmem:[#allocation7 + $0x80] sm:$0xff]
    %v129 = vld [vmem:[#allocation7 + $0x88] sm:$0xff]
    %v130 = vld [vmem:[#allocation7 + $0x90] sm:$0xff]
    %v131 = vld [vmem:[#allocation7 + $0x98] sm:$0xff]
    %v132 = vld [vmem:[#allocation2] sm:$0xff]
    %v133 = vld [vmem:[#allocation2 + $0x8] sm:$0xff]
    %v134 = vld [vmem:[#allocation2 + $0x10] sm:$0xff]
    %v135 = vld [vmem:[#allocation2 + $0x18] sm:$0xff]
    %v136 = vld [vmem:[#allocation2 + $0x20] sm:$0xff]
    %v137 = vld [vmem:[#allocation2 + $0x28] sm:$0xff]
    %v138 = vld [vmem:[#allocation2 + $0x30] sm:$0xff]
    %v139 = vld [vmem:[#allocation2 + $0x38] sm:$0xff]
    %v140 = vld [vmem:[#allocation2 + $0x40] sm:$0xff]
    %v141 = vld [vmem:[#allocation2 + $0x48] sm:$0xff]
    %v142 = vunpack.c.l.s8.bf16 %v132
    %v143 = vunpack.c.l.s8.bf16 %v133
    %v144 = vunpack.c.h.s8.bf16 %v132
    %v145 = vunpack.c.h.s8.bf16 %v133
    %v146 = vunpack.c.l.s8.bf16 %v134
    %v147 = vunpack.c.l.s8.bf16 %v135
    %v148 = vunpack.c.h.s8.bf16 %v134
    %v149 = vunpack.c.h.s8.bf16 %v135
    %v150 = vunpack.c.l.s8.bf16 %v136
    %v151 = vunpack.c.l.s8.bf16 %v137
    %v152 = vunpack.c.h.s8.bf16 %v136
    %v153 = vunpack.c.h.s8.bf16 %v137
    %v154 = vunpack.c.l.s8.bf16 %v138
    %v155 = vunpack.c.l.s8.bf16 %v139
    %v156 = vunpack.c.h.s8.bf16 %v138
    %v157 = vunpack.c.h.s8.bf16 %v139
    %v158 = vunpack.c.l.s8.bf16 %v140
    %v159 = vunpack.c.l.s8.bf16 %v141
    %v160 = vunpack.c.h.s8.bf16 %v140
    %v161 = vunpack.c.h.s8.bf16 %v141
    %v194 = vunpack.c.l.b16 %v80
    %v195 = vunpack.c.l.b16 %v81
    %v196 = vunpack.c.l.b16 %v82
    %v197 = vunpack.c.l.b16 %v83
    %v198 = vunpack.c.l.b16 %v84
    %v199 = vunpack.c.l.b16 %v85
    %v200 = vunpack.c.l.b16 %v86
    %v201 = vunpack.c.l.b16 %v87
    %v202 = vunpack.c.l.b16 %v88
    %v203 = vunpack.c.l.b16 %v89
    %v204 = vunpack.c.l.b16 %v90
    %v205 = vunpack.c.l.b16 %v91
    %v206 = vunpack.c.l.b16 %v92
    %v207 = vunpack.c.l.b16 %v93
    %v208 = vunpack.c.l.b16 %v94
    %v209 = vunpack.c.l.b16 %v95
    %v210 = vunpack.c.l.b16 %v96
    %v211 = vunpack.c.l.b16 %v97
    %v212 = vunpack.c.l.b16 %v98
    %v213 = vunpack.c.l.b16 %v99
    %v214 = vunpack.c.l.b16 %v100
    %v215 = vunpack.c.l.b16 %v101
    %v216 = vunpack.c.l.b16 %v102
    %v217 = vunpack.c.l.b16 %v103
    %v218 = vunpack.c.l.b16 %v104
    %v219 = vunpack.c.l.b16 %v105
    %v220 = vunpack.c.l.b16 %v106
    %v221 = vunpack.c.l.b16 %v107
    %v222 = vunpack.c.l.b16 %v108
    %v223 = vunpack.c.l.b16 %v109
    %v224 = vunpack.c.l.b16 %v110
    %v225 = vunpack.c.l.b16 %v111
    %v226 = vpack.c.b16 %v195, %v194
    %v227 = vpack.c.b16 %v197, %v196
    %v228 = vpack.c.b16 %v199, %v198
    %v229 = vpack.c.b16 %v201, %v200
    %v230 = vpack.c.b16 %v203, %v202
    %v231 = vpack.c.b16 %v205, %v204
    %v232 = vpack.c.b16 %v207, %v206
    %v233 = vpack.c.b16 %v209, %v208
    %v234 = vpack.c.b16 %v211, %v210
    %v235 = vpack.c.b16 %v213, %v212
    %v236 = vpack.c.b16 %v215, %v214
    %v237 = vpack.c.b16 %v217, %v216
    %v238 = vpack.c.b16 %v219, %v218
    %v239 = vpack.c.b16 %v221, %v220
    %v240 = vpack.c.b16 %v223, %v222
    %v241 = vpack.c.b16 %v225, %v224
    %258 = vmatprep.subr.bf16.mxu0 0
    %259 = vmatpush1.bf16.msra.mxu0 %v226
    %260 = vmatprep.subr.bf16.mxu0 0
    %261 = vmatpush1.bf16.msra.mxu0 %v227
    %262 = vmatprep.subr.bf16.mxu0 0
    %263 = vmatpush1.bf16.msra.mxu0 %v228
    %264 = vmatprep.subr.bf16.mxu0 0
    %265 = vmatpush1.bf16.msra.mxu0 %v229
    %266 = vmatprep.subr.bf16.mxu0 0
    %267 = vmatpush1.bf16.msra.mxu0 %v230
    %268 = vmatprep.subr.bf16.mxu0 0
    %269 = vmatpush1.bf16.msra.mxu0 %v231
    %270 = vmatprep.subr.bf16.mxu0 0
    %271 = vmatpush1.bf16.msra.mxu0 %v232
    %272 = vmatprep.subr.bf16.mxu0 0
    %273 = vmatpush1.bf16.msra.mxu0 %v233
    %274 = vmatprep.subr.bf16.mxu0 0
    %275 = vmatpush1.bf16.msra.mxu0 %v234
    %276 = vmatprep.subr.bf16.mxu0 0
    %277 = vmatpush1.bf16.msra.mxu0 %v235
    %278 = vmatprep.subr.bf16.mxu0 0
    %279 = vmatpush1.bf16.msra.mxu0 %v236
    %280 = vmatprep.subr.bf16.mxu0 0
    %281 = vmatpush1.bf16.msra.mxu0 %v237
    %282 = vmatprep.subr.bf16.mxu0 0
    %283 = vmatpush1.bf16.msra.mxu0 %v238
    %284 = vmatprep.subr.bf16.mxu0 0
    %285 = vmatpush1.bf16.msra.mxu0 %v239
    %286 = vmatprep.subr.bf16.mxu0 0
    %287 = vmatpush1.bf16.msra.mxu0 %v240
    %288 = vmatprep.subr.bf16.mxu0 0
    %289 = vmatpush1.bf16.msra.mxu0 %v241
    %290 = vmatprep.mubr.bf16.mxu0 %v143
    %291 = vmatmul.mubr.bf16.gmra.mrb[0].mxu0 %v142
    %v292 = vpop.f32.mrb[0].mxu0
    %v293 = vadd.f32 0.0, %v292
    %v294 = vpop.f32.mrb[0].mxu0
    %v295 = vpop.f32.mrb[0].mxu0
    %v296 = vadd.f32 0.0, %v295
    %v297 = vpop.f32.mrb[0].mxu0
    %298 = vmatprep.mubr.bf16.mxu0 %v145
    %299 = vmatmul.mubr.bf16.gmra.mrb[0].mxu0 %v144
    %v300 = vpop.f32.mrb[0].mxu0
    %v301 = vadd.f32 0.0, %v300
    %v302 = vpop.f32.mrb[0].mxu0
    %v303 = vpop.f32.mrb[0].mxu0
    %v304 = vadd.f32 0.0, %v303
    %v305 = vpop.f32.mrb[0].mxu0
    %306 = vmatprep.mubr.bf16.mxu0 %v147
    %307 = vmatmul.mubr.bf16.gmra.mrb[0].mxu0 %v146
    %v308 = vpop.f32.mrb[0].mxu0
    %v309 = vadd.f32 0.0, %v308
    %v310 = vpop.f32.mrb[0].mxu0
    %v311 = vpop.f32.mrb[0].mxu0
    %v312 = vadd.f32 0.0, %v311
    %v313 = vpop.f32.mrb[0].mxu0
    %314 = vmatprep.mubr.bf16.mxu0 %v149
    %315 = vmatmul.mubr.bf16.gmra.mrb[0].mxu0 %v148
    %v316 = vpop.f32.mrb[0].mxu0
    %v317 = vadd.f32 0.0, %v316
    %v318 = vpop.f32.mrb[0].mxu0
    %v319 = vpop.f32.mrb[0].mxu0
    %v320 = vadd.f32 0.0, %v319
    %v321 = vpop.f32.mrb[0].mxu0
    %322 = vmatprep.mubr.bf16.mxu0 %v151
    %323 = vmatmul.mubr.bf16.gmra.mrb[0].mxu0 %v150
    %v324 = vpop.f32.mrb[0].mxu0
    %v325 = vadd.f32 0.0, %v324
    %v326 = vpop.f32.mrb[0].mxu0
    %v327 = vpop.f32.mrb[0].mxu0
    %v328 = vadd.f32 0.0, %v327
    %v329 = vpop.f32.mrb[0].mxu0
    %330 = vmatprep.mubr.bf16.mxu0 %v153
    %331 = vmatmul.mubr.bf16.gmra.mrb[0].mxu0 %v152
    %v332 = vpop.f32.mrb[0].mxu0
    %v333 = vadd.f32 0.0, %v332
    %v334 = vpop.f32.mrb[0].mxu0
    %v335 = vpop.f32.mrb[0].mxu0
    %v336 = vadd.f32 0.0, %v335
    %v337 = vpop.f32.mrb[0].mxu0
    %338 = vmatprep.mubr.bf16.mxu0 %v155
    %339 = vmatmul.mubr.bf16.gmra.mrb[0].mxu0 %v154
    %v340 = vpop.f32.mrb[0].mxu0
    %v341 = vadd.f32 0.0, %v340
    %v342 = vpop.f32.mrb[0].mxu0
    %v343 = vpop.f32.mrb[0].mxu0
    %v344 = vadd.f32 0.0, %v343
    %v345 = vpop.f32.mrb[0].mxu0
    %346 = vmatprep.mubr.bf16.mxu0 %v157
    %347 = vmatmul.mubr.bf16.gmra.mrb[0].mxu0 %v156
    %v348 = vpop.f32.mrb[0].mxu0
    %v349 = vadd.f32 0.0, %v348
    %v350 = vpop.f32.mrb[0].mxu0
    %v351 = vpop.f32.mrb[0].mxu0
    %v352 = vadd.f32 0.0, %v351
    %v353 = vpop.f32.mrb[0].mxu0
    %354 = vmatprep.mubr.bf16.mxu0 %v159
    %355 = vmatmul.mubr.bf16.gmra.mrb[0].mxu0 %v158
    %v356 = vpop.f32.mrb[0].mxu0
    %v357 = vadd.f32 0.0, %v356
    %v358 = vpop.f32.mrb[0].mxu0
    %v359 = vpop.f32.mrb[0].mxu0
    %v360 = vadd.f32 0.0, %v359
    %v361 = vpop.f32.mrb[0].mxu0
    %362 = vmatprep.mubr.bf16.mxu0 %v161
    %363 = vmatmul.mubr.bf16.gmra.mrb[0].mxu0 %v160
    %v364 = vpop.f32.mrb[0].mxu0
    %v365 = vadd.f32 0.0, %v364
    %v366 = vpop.f32.mrb[0].mxu0
    %v367 = vpop.f32.mrb[0].mxu0
    %v368 = vadd.f32 0.0, %v367
    %v369 = vpop.f32.mrb[0].mxu0
    %370 = vdwg.mxu0
    %v371 = vadd.f32 %v112, %v293
    %v372 = vadd.f32 %v113, %v296
    %v373 = vadd.f32 %v114, %v301
    %v374 = vadd.f32 %v115, %v304
    %v375 = vadd.f32 %v116, %v309
    %v376 = vadd.f32 %v117, %v312
    %v377 = vadd.f32 %v118, %v317
    %v378 = vadd.f32 %v119, %v320
    %v379 = vadd.f32 %v120, %v325
    %v380 = vadd.f32 %v121, %v328
    %v381 = vadd.f32 %v122, %v333
    %v382 = vadd.f32 %v123, %v336
    %v383 = vadd.f32 %v124, %v341
    %v384 = vadd.f32 %v125, %v344
    %v385 = vadd.f32 %v126, %v349
    %v386 = vadd.f32 %v127, %v352
    %v387 = vadd.f32 %v128, %v357
    %v388 = vadd.f32 %v129, %v360
    %v389 = vadd.f32 %v130, %v365
    %v390 = vadd.f32 %v131, %v368
    %391 = vst [vmem:[#allocation7] sm:$0xff] %v371
    %392 = vst [vmem:[#allocation7 + $0x8] sm:$0xff] %v372
    %393 = vst [vmem:[#allocation7 + $0x10] sm:$0xff] %v373
    %394 = vst [vmem:[#allocation7 + $0x18] sm:$0xff] %v374
    %395 = vst [vmem:[#allocation7 + $0x20] sm:$0xff] %v375
    %396 = vst [vmem:[#allocation7 + $0x28] sm:$0xff] %v376
    %397 = vst [vmem:[#allocation7 + $0x30] sm:$0xff] %v377
    %398 = vst [vmem:[#allocation7 + $0x38] sm:$0xff] %v378
    %399 = vst [vmem:[#allocation7 + $0x40] sm:$0xff] %v379
    %400 = vst [vmem:[#allocation7 + $0x48] sm:$0xff] %v380
    %401 = vst [vmem:[#allocation7 + $0x50] sm:$0xff] %v381
    %402 = vst [vmem:[#allocation7 + $0x58] sm:$0xff] %v382
    %403 = vst [vmem:[#allocation7 + $0x60] sm:$0xff] %v383
    %404 = vst [vmem:[#allocation7 + $0x68] sm:$0xff] %v384
    %405 = vst [vmem:[#allocation7 + $0x70] sm:$0xff] %v385
    %406 = vst [vmem:[#allocation7 + $0x78] sm:$0xff] %v386
    %407 = vst [vmem:[#allocation7 + $0x80] sm:$0xff] %v387
    %408 = vst [vmem:[#allocation7 + $0x88] sm:$0xff] %v388
    %409 = vst [vmem:[#allocation7 + $0x90] sm:$0xff] %v389
    %410 = vst [vmem:[#allocation7 + $0x98] sm:$0xff] %v390
    // Predicated region
    $region26: #{tpu_custom_call.1} parent=1 // pred_check
      _
    $region27: #{tpu_custom_call.1} parent=1 // pred_check_branch
      %412 = sbr.rel (0) target = $region29
    $region28: #{tpu_custom_call.1} parent=1 // pred_region
      %s414 = ssub.s32 2560, 2560
      %415 = vsyncadd [#allocation4], %s414
      %s416 = sshll.u32 [#allocation7], 4
      %s417 = int_to_ptr.vmem [resolvable:$true] %s416
      %422 = dma.vmem_to_hbm [thread:$0]  %s417, 2560, %s3, [#allocation4], 128, 128, 8
    $region29: #{tpu_custom_call.1} parent=1 // pred_fallthru
      _
    // Predicated region
    $region30: #{tpu_custom_call.1} parent=1 // pred_check
      _
    $region31: #{tpu_custom_call.1} parent=1 // pred_check_branch
      %424 = sbr.rel (0) target = $region33
    $region32: #{tpu_custom_call.1} parent=1 // pred_region
      %425 = dma.done [#allocation4], 2560
    $region33: #{tpu_custom_call.1} parent=1 // pred_fallthru
      _
    %426 = vsyncpa [#allocation3], 1
    %427 = vsyncpa [#allocation6], 1
    %428 = vsyncpa [#allocation4], 1

</llo_original>
